<compile_context>
chip_gen: v7x
topology: tpu7x:2x2x1
jax: 0.10.0
libtpu: 0.0.40
codegen_flags: <defaults>
</compile_context>

<pallas_src>
import jax
import jax.numpy as jnp
from jax import lax
from jax.experimental import pallas as pl
from jax.experimental.pallas import tpu as pltpu


def _round_up(x, m):
    return ((x + m - 1) // m) * m


def _vmem_cap_bytes():
    """Per-core VMEM capacity (generation aware), with a conservative fallback."""
    try:
        cap = getattr(pltpu.get_tpu_info(), "vmem_capacity_bytes", None)
        if cap:
            return int(cap)
    except Exception:
        pass
    return 64 << 20  # v7x per-TensorCore


def _rec_kernel(user_idx_ref, item1_idx_ref, item2_idx_ref,
                user_tbl_t_ref, item_tbl_t_ref,
                w_fold_t_ref, b_genre_ref,
                ratings_ref, genres_ref):
    """Batch-on-lanes fused one-hot gather + ratings + folded genre head.

    Per batch tile of TB lanes:
      user_idx_ref / item*_idx_ref : (1, TB)  int32   (blocked over batch)
      user_tbl_t_ref               : (D, Nu)  bf16/f32 (resident, single-buffered)
      item_tbl_t_ref               : (D, Ni)  bf16/f32 (resident)
      w_fold_t_ref                 : (G, Ni)  bf16/f32 (= (embd_item @ W)^T, resident)
      b_genre_ref                  : (G, 1)   f32      (resident)
      ratings_ref                  : (1, TB)  f32      (lane-dense store)
      genres_ref                   : (G, TB)  f32      (lane-dense store)
    """
    nu = user_tbl_t_ref.shape[1]
    ni = item_tbl_t_ref.shape[1]
    tb = user_idx_ref.shape[1]
    cdt = user_tbl_t_ref.dtype  # matmul operand dtype (bf16 by default)

    # --- one-hot gathers on the MXU (one-hot is exactly representable in bf16) ---
    iota_u = lax.broadcasted_iota(jnp.int32, (nu, tb), 0)
    onehot_u = (iota_u == user_idx_ref[...]).astype(cdt)               # (Nu, TB)

    # item_1 / item_2 share one hoisted iota (JAX does not CSE broadcasts).
    iota_i = lax.broadcasted_iota(jnp.int32, (ni, tb), 0)
    onehot_i1 = (iota_i == item1_idx_ref[...]).astype(cdt)             # (Ni, TB)
    onehot_i2 = (iota_i == item2_idx_ref[...]).astype(cdt)             # (Ni, TB)

    u_t = jnp.dot(user_tbl_t_ref[...], onehot_u,
                  preferred_element_type=jnp.float32)                  # (D, TB)
    i1_t = jnp.dot(item_tbl_t_ref[...], onehot_i1,
                   preferred_element_type=jnp.float32)                 # (D, TB)

    # ratings[b] = <u[b], i1[b]> ; reduce over D (sublanes), batch stays on lanes.
    ratings_ref[...] = jnp.sum(u_t * i1_t, axis=0, keepdims=True)      # (1, TB)

    # Folded genre head: genres^T = (W^T @ embd_item^T) @ onehot_i2 + b.
    genres_ref[...] = (
        jnp.dot(w_fold_t_ref[...], onehot_i2,
                preferred_element_type=jnp.float32)
        + b_genre_ref[...]
    )


def prepare_params(params, *, table_dtype=jnp.bfloat16):
    """One-time (per weight update) layout prep.

    Transposes the embedding tables to the batch-on-lanes (D, N) layout and
    algebraically folds the genre head: genres = embd_item[item_2] @ W + b
    == (W^T @ embd_item^T)[:, item_2] + b.  Doing this here (not per forward)
    avoids paying a full table read+write every call.
    """
    embd_user = jnp.asarray(params["embd_user"], jnp.float32)   # (Nu, D)
    embd_item = jnp.asarray(params["embd_item"], jnp.float32)   # (Ni, D)
    w_genre = jnp.asarray(params["w_genre"], jnp.float32)       # (D, G)
    b_genre = jnp.asarray(params["b_genre"], jnp.float32)       # (1, G)
    g = w_genre.shape[1]
    w_fold_t = (embd_item @ w_genre).T                          # (G, Ni), f32 math
    return {
        "user_tbl_t": embd_user.T.astype(table_dtype),          # (D, Nu)
        "item_tbl_t": embd_item.T.astype(table_dtype),          # (D, Ni)
        "w_fold_t": w_fold_t.astype(table_dtype),               # (G, Ni)
        "b_genre_col": b_genre.reshape(g, 1).astype(jnp.float32),  # (G, 1)
    }


def model_forward(user, item_1, item_2, prepared, *, tb_max=2048,
                  genres_transposed=False):
    """user/item_1/item_2: int (B,); returns (ratings (B,), genres (B, G))."""
    user_tbl_t = prepared["user_tbl_t"]       # (D, Nu)
    item_tbl_t = prepared["item_tbl_t"]       # (D, Ni)
    w_fold_t = prepared["w_fold_t"]           # (G, Ni)
    b_genre_col = prepared["b_genre_col"]     # (G, 1)

    d, nu = user_tbl_t.shape
    ni = item_tbl_t.shape[1]
    g = w_fold_t.shape[0]
    b = user.shape[0]

    # ---- batch tiling: lane-dense, as wide as reasonable, but keep >= 2 tiles
    # when the batch allows it so v7x's two TensorCores can split the parallel
    # axis (v5e/v6e have a single TC and just see fewer, wider grid steps). ----
    lane = 128
    b_pad = _round_up(b, lane)
    if b_pad <= 2 * lane:
        tb = b_pad
    else:
        half = _round_up((b_pad + 1) // 2, lane)
        tb = min(tb_max, half)
    b_pad = _round_up(b, tb)
    n_tiles = b_pad // tb

    def prep_idx(x):
        x = jnp.asarray(x, jnp.int32)
        x = jnp.pad(x, (0, b_pad - b))        # pad with valid row 0
        return x.reshape(1, b_pad)

    u_idx = prep_idx(user)
    i1_idx = prep_idx(item_1)
    i2_idx = prep_idx(item_2)

    # ---- generation-aware VMEM budget (residents single-buffered, per-tile
    # I/O double-buffered, plus in-kernel intermediates and slack). ----
    tbytes = jnp.dtype(user_tbl_t.dtype).itemsize
    resident_bytes = tbytes * (d * nu + d * ni + g * ni) + 4 * g
    per_tile_io = 4 * (3 * tb + tb + g * tb)                 # int32 idx + f32 outs
    intermed = tbytes * (nu + 2 * ni) * tb + 4 * 2 * d * tb  # one-hots + u/i1
    need = resident_bytes + 2 * per_tile_io + intermed + (4 << 20)
    vmem_limit = int(min(max(need, 16 << 20), int(0.70 * _vmem_cap_bytes())))

    flops = (2 * b_pad * d * (nu + ni)        # user + item_1 one-hot gathers (MXU)
             + 2 * b_pad * ni * g             # folded genre head (MXU)
             + 2 * b_pad * d)                 # ratings dot products (VPU)
    bytes_accessed = (tbytes * (d * (nu + ni) + g * ni) + 4 * g   # params
                      + 4 * 3 * b_pad                             # indices
                      + 4 * (b_pad + g * b_pad))                  # outputs

    # Resident operands: whole array in VMEM, fetched once, single-buffered.
    resident_vmem = pltpu.MemorySpace.VMEM

    ratings_t, genres_t = pl.pallas_call(
        _rec_kernel,
        out_shape=(
            jax.ShapeDtypeStruct((1, b_pad), jnp.float32),
            jax.ShapeDtypeStruct((g, b_pad), jnp.float32),
        ),
        grid_spec=pltpu.PrefetchScalarGridSpec(
            num_scalar_prefetch=0,
            grid=(n_tiles,),
            in_specs=[
                pl.BlockSpec((1, tb), lambda i: (0, i)),          # user idx
                pl.BlockSpec((1, tb), lambda i: (0, i)),          # item_1 idx
                pl.BlockSpec((1, tb), lambda i: (0, i)),          # item_2 idx
                pl.BlockSpec(memory_space=resident_vmem),         # user table^T
                pl.BlockSpec(memory_space=resident_vmem),         # item table^T
                pl.BlockSpec(memory_space=resident_vmem),         # folded genre W
                pl.BlockSpec(memory_space=resident_vmem),         # genre bias
            ],
            out_specs=[
                pl.BlockSpec((1, tb), lambda i: (0, i)),          # ratings^T
                pl.BlockSpec((g, tb), lambda i: (0, i)),          # genres^T
            ],
        ),
        compiler_params=pltpu.CompilerParams(
            dimension_semantics=("parallel",),
            vmem_limit_bytes=vmem_limit,
        ),
        cost_estimate=pl.CostEstimate(
            flops=int(flops),
            transcendentals=0,
            bytes_accessed=int(bytes_accessed),
        ),
    )(u_idx, i1_idx, i2_idx, user_tbl_t, item_tbl_t, w_fold_t, b_genre_col)

    ratings = ratings_t[0, :b]                # (B,)
    genres_gb = genres_t[:, :b]               # (G, B), lane-dense
    if genres_transposed:
        return ratings, genres_gb             # consumers that accept (G, B)
    # TODO(synk): consumers that can take (G, B) should pass
    # genres_transposed=True to skip this extra G*B read+write transpose pass.
    return ratings, genres_gb.T               # (B, G) to match the module spec


def init_params(key, user_size, item_size, emb_dim, genre_size):
    k1, k2, k3, k4 = jax.random.split(key, 4)
    return {
        "embd_user": jax.random.normal(k1, (user_size, emb_dim), jnp.float32),
        "embd_item": jax.random.normal(k2, (item_size, emb_dim), jnp.float32),
        "w_genre": jax.random.normal(k3, (emb_dim, genre_size), jnp.float32)
                   * (1.0 / jnp.sqrt(emb_dim)),
        "b_genre": jax.random.normal(k4, (1, genre_size), jnp.float32) * 0.01,
    }


if __name__ == "__main__":
    user_size, item_size, emb_dim, genre_size = 10, 12, 32, 16
    batch = 8

    key = jax.random.PRNGKey(0)
    kp, ku, ki1, ki2 = jax.random.split(key, 4)

    params = init_params(kp, user_size, item_size, emb_dim, genre_size)
    user = jax.random.randint(ku, (batch,), 0, user_size, dtype=jnp.int32)
    item_1 = jax.random.randint(ki1, (batch,), 0, item_size, dtype=jnp.int32)
    item_2 = jax.random.randint(ki2, (batch,), 0, item_size, dtype=jnp.int32)

    prepared = prepare_params(params)          # one-time layout prep (bf16 tables)
    fwd = jax.jit(model_forward)
    ratings, genres = fwd(user, item_1, item_2, prepared)
    jax.block_until_ready((ratings, genres))

    assert ratings.shape == (batch,)
    assert genres.shape == (batch, genre_size)

    # --- tight check vs. a bf16-table-emulating reference (kernel logic exact) ---
    f32 = jnp.float32
    ue_bf = params["embd_user"].astype(jnp.bfloat16).astype(f32)[user]
    i1e_bf = params["embd_item"].astype(jnp.bfloat16).astype(f32)[item_1]
    w_fold_bf = (params["embd_item"] @ params["w_genre"]).astype(jnp.bfloat16).astype(f32)
    ref_ratings_bf = jnp.sum(ue_bf * i1e_bf, axis=-1)
    ref_genres_bf = w_fold_bf[item_2] + params["b_genre"]
    assert jnp.allclose(ratings, ref_ratings_bf, atol=1e-3, rtol=1e-3)
    assert jnp.allclose(genres, ref_genres_bf, atol=1e-3, rtol=1e-3)

    # --- loose sanity check vs. the true f32 reference (bf16 table rounding) ---
    ue = params["embd_user"][user]
    i1e = params["embd_item"][item_1]
    i2e = params["embd_item"][item_2]
    ref_ratings = jnp.sum(ue * i1e, axis=-1)
    ref_genres = i2e @ params["w_genre"] + params["b_genre"]
    assert jnp.allclose(ratings, ref_ratings, atol=1.5e-1, rtol=5e-2)
    assert jnp.allclose(genres, ref_genres, atol=5e-2, rtol=5e-2)

    print("KERNEL_OK")
</pallas_src>

<mosaic_0001>
module attributes {stable_mosaic.version = 11 : i64} {
  func.func @_rec_kernel(%arg0: i32, %arg1: memref<1x128xi32, #tpu.memory_space<vmem>>, %arg2: memref<1x128xi32, #tpu.memory_space<vmem>>, %arg3: memref<1x128xi32, #tpu.memory_space<vmem>>, %arg4: memref<32x10xbf16, #tpu.memory_space<vmem>>, %arg5: memref<32x12xbf16, #tpu.memory_space<vmem>>, %arg6: memref<16x12xbf16, #tpu.memory_space<vmem>>, %arg7: memref<16x1xf32, #tpu.memory_space<vmem>>, %arg8: memref<1x128xf32, #tpu.memory_space<vmem>>, %arg9: memref<16x128xf32, #tpu.memory_space<vmem>>) attributes {dimension_semantics = [#tpu.dimension_semantics<parallel>], iteration_bounds = array<i64: 1>, scalar_prefetch = 0 : i64, scratch_operands = 0 : i64, tpu.core_type = #tpu.core_type<tc>, window_params = [{transform_indices = @transform_0, window_bounds = array<i64: 1, 128>}, {transform_indices = @transform_1, window_bounds = array<i64: 1, 128>}, {transform_indices = @transform_2, window_bounds = array<i64: 1, 128>}, {pipeline_mode = #tpu.pipeline_mode<synchronous>, transform_indices = @transform_3, window_bounds = array<i64: 32, 10>}, {pipeline_mode = #tpu.pipeline_mode<synchronous>, transform_indices = @transform_4, window_bounds = array<i64: 32, 12>}, {pipeline_mode = #tpu.pipeline_mode<synchronous>, transform_indices = @transform_5, window_bounds = array<i64: 16, 12>}, {pipeline_mode = #tpu.pipeline_mode<synchronous>, transform_indices = @transform_6, window_bounds = array<i64: 16, 1>}, {transform_indices = @transform_7, window_bounds = array<i64: 1, 128>}, {transform_indices = @transform_8, window_bounds = array<i64: 16, 128>}]} {
    %0 = tpu.iota {dimensions = array<i32: 0>} : vector<10x128xi32>
    %c0 = arith.constant 0 : index
    %c0_0 = arith.constant 0 : index
    %1 = vector.load %arg1[%c0, %c0_0] : memref<1x128xi32, #tpu.memory_space<vmem>>, vector<1x128xi32>
    %2 = vector.broadcast %1 : vector<1x128xi32> to vector<10x128xi32>
    %3 = arith.cmpi eq, %0, %2 : vector<10x128xi32>
    %4 = arith.extui %3 : vector<10x128xi1> to vector<10x128xi32>
    %5 = arith.sitofp %4 : vector<10x128xi32> to vector<10x128xf32>
    %6 = arith.truncf %5 : vector<10x128xf32> to vector<10x128xbf16>
    %7 = tpu.iota {dimensions = array<i32: 0>} : vector<12x128xi32>
    %c0_1 = arith.constant 0 : index
    %c0_2 = arith.constant 0 : index
    %8 = vector.load %arg2[%c0_1, %c0_2] : memref<1x128xi32, #tpu.memory_space<vmem>>, vector<1x128xi32>
    %9 = vector.broadcast %8 : vector<1x128xi32> to vector<12x128xi32>
    %10 = arith.cmpi eq, %7, %9 : vector<12x128xi32>
    %11 = arith.extui %10 : vector<12x128xi1> to vector<12x128xi32>
    %12 = arith.sitofp %11 : vector<12x128xi32> to vector<12x128xf32>
    %13 = arith.truncf %12 : vector<12x128xf32> to vector<12x128xbf16>
    %c0_3 = arith.constant 0 : index
    %c0_4 = arith.constant 0 : index
    %14 = vector.load %arg3[%c0_3, %c0_4] : memref<1x128xi32, #tpu.memory_space<vmem>>, vector<1x128xi32>
    %15 = vector.broadcast %14 : vector<1x128xi32> to vector<12x128xi32>
    %16 = arith.cmpi eq, %7, %15 : vector<12x128xi32>
    %17 = arith.extui %16 : vector<12x128xi1> to vector<12x128xi32>
    %18 = arith.sitofp %17 : vector<12x128xi32> to vector<12x128xf32>
    %19 = arith.truncf %18 : vector<12x128xf32> to vector<12x128xbf16>
    %c0_5 = arith.constant 0 : index
    %c0_6 = arith.constant 0 : index
    %20 = vector.load %arg4[%c0_5, %c0_6] : memref<32x10xbf16, #tpu.memory_space<vmem>>, vector<32x10xbf16>
    %cst = arith.constant dense<0.000000e+00> : vector<32x128xf32>
    %21 = tpu.matmul %20, %6, %cst {dimension_numbers = #tpu.dot_dimension_numbers<[1], [0], [0], [1], [0, 0, 1, 1], [], []>} : vector<32x10xbf16>, vector<10x128xbf16>, vector<32x128xf32> -> vector<32x128xf32>
    %c0_7 = arith.constant 0 : index
    %c0_8 = arith.constant 0 : index
    %22 = vector.load %arg5[%c0_7, %c0_8] : memref<32x12xbf16, #tpu.memory_space<vmem>>, vector<32x12xbf16>
    %cst_9 = arith.constant dense<0.000000e+00> : vector<32x128xf32>
    %23 = tpu.matmul %22, %13, %cst_9 {dimension_numbers = #tpu.dot_dimension_numbers<[1], [0], [0], [1], [0, 0, 1, 1], [], []>} : vector<32x12xbf16>, vector<12x128xbf16>, vector<32x128xf32> -> vector<32x128xf32>
    %24 = arith.mulf %21, %23 : vector<32x128xf32>
    %cst_10 = arith.constant dense<0.000000e+00> : vector<128xf32>
    %25 = vector.multi_reduction <add>, %24, %cst_10 [0] : vector<32x128xf32> to vector<128xf32>
    %26 = vector.shape_cast %25 : vector<128xf32> to vector<1x128xf32>
    %c0_11 = arith.constant 0 : index
    %c0_12 = arith.constant 0 : index
    %27 = vector.load %arg8[%c0_11, %c0_12] : memref<1x128xf32, #tpu.memory_space<vmem>>, vector<1x128xf32>
    tpu.vector_store %arg8[%c0_11, %c0_12], %26 {strides = array<i32>} : memref<1x128xf32, #tpu.memory_space<vmem>>, vector<1x128xf32>,
    %c0_13 = arith.constant 0 : index
    %c0_14 = arith.constant 0 : index
    %28 = vector.load %arg6[%c0_13, %c0_14] : memref<16x12xbf16, #tpu.memory_space<vmem>>, vector<16x12xbf16>
    %cst_15 = arith.constant dense<0.000000e+00> : vector<16x128xf32>
    %29 = tpu.matmul %28, %19, %cst_15 {dimension_numbers = #tpu.dot_dimension_numbers<[1], [0], [0], [1], [0, 0, 1, 1], [], []>} : vector<16x12xbf16>, vector<12x128xbf16>, vector<16x128xf32> -> vector<16x128xf32>
    %c0_16 = arith.constant 0 : index
    %c0_17 = arith.constant 0 : index
    %30 = vector.load %arg7[%c0_16, %c0_17] : memref<16x1xf32, #tpu.memory_space<vmem>>, vector<16x1xf32>
    %31 = vector.broadcast %30 : vector<16x1xf32> to vector<16x128xf32>
    %32 = arith.addf %29, %31 : vector<16x128xf32>
    %c0_18 = arith.constant 0 : index
    %c0_19 = arith.constant 0 : index
    %33 = vector.load %arg9[%c0_18, %c0_19] : memref<16x128xf32, #tpu.memory_space<vmem>>, vector<16x128xf32>
    tpu.vector_store %arg9[%c0_18, %c0_19], %32 {strides = array<i32>} : memref<16x128xf32, #tpu.memory_space<vmem>>, vector<16x128xf32>,
    return
  }
  func.func @transform_0(%arg0: i32) -> (i32, i32) {
    %c0_i32 = arith.constant 0 : i32
    %c0_i32_0 = arith.constant 0 : i32
    return %c0_i32, %arg0 : i32, i32
  }
  func.func @transform_1(%arg0: i32) -> (i32, i32) {
    %c0_i32 = arith.constant 0 : i32
    %c0_i32_0 = arith.constant 0 : i32
    return %c0_i32, %arg0 : i32, i32
  }
  func.func @transform_2(%arg0: i32) -> (i32, i32) {
    %c0_i32 = arith.constant 0 : i32
    %c0_i32_0 = arith.constant 0 : i32
    return %c0_i32, %arg0 : i32, i32
  }
  func.func @transform_3(%arg0: i32) -> (i32, i32) {
    %c0_i32 = arith.constant 0 : i32
    %c0_i32_0 = arith.constant 0 : i32
    %c0_i32_1 = arith.constant 0 : i32
    return %c0_i32, %c0_i32_0 : i32, i32
  }
  func.func @transform_4(%arg0: i32) -> (i32, i32) {
    %c0_i32 = arith.constant 0 : i32
    %c0_i32_0 = arith.constant 0 : i32
    %c0_i32_1 = arith.constant 0 : i32
    return %c0_i32, %c0_i32_0 : i32, i32
  }
  func.func @transform_5(%arg0: i32) -> (i32, i32) {
    %c0_i32 = arith.constant 0 : i32
    %c0_i32_0 = arith.constant 0 : i32
    %c0_i32_1 = arith.constant 0 : i32
    return %c0_i32, %c0_i32_0 : i32, i32
  }
  func.func @transform_6(%arg0: i32) -> (i32, i32) {
    %c0_i32 = arith.constant 0 : i32
    %c0_i32_0 = arith.constant 0 : i32
    %c0_i32_1 = arith.constant 0 : i32
    return %c0_i32, %c0_i32_0 : i32, i32
  }
  func.func @transform_7(%arg0: i32) -> (i32, i32) {
    %c0_i32 = arith.constant 0 : i32
    %c0_i32_0 = arith.constant 0 : i32
    return %c0_i32, %arg0 : i32, i32
  }
  func.func @transform_8(%arg0: i32) -> (i32, i32) {
    %c0_i32 = arith.constant 0 : i32
    %c0_i32_0 = arith.constant 0 : i32
    return %c0_i32, %arg0 : i32, i32
  }
}

</mosaic_0001>

<llo_original>
// kernel: model_forward.1
$region0: #{model_forward.1}
  #allocation0 [shape = 'u32[]', space=smem, size = 0x4, offset = 0x4, fixed_abs, tag = 'smem constant byte address 0x4 - core index']
  #allocation1 [shape = 'u32[144,128]{1,0:T(1,128)}', space=vmem, size = 0x12000, scoped, tag = 'internal scratch']
  %s0 = inlined_call_operand.vmem [shape: s32[1,128], index: 0, kind: input, shape index: {}]
  %s1 = inlined_call_operand.vmem [shape: s32[1,128], index: 1, kind: input, shape index: {}]
  %s2 = inlined_call_operand.vmem [shape: s32[1,128], index: 2, kind: input, shape index: {}]
  %s3 = inlined_call_operand.vmem [shape: bf16[32,10], index: 3, kind: input, shape index: {}]
  %s4 = inlined_call_operand.vmem [shape: bf16[32,12], index: 4, kind: input, shape index: {}]
  %s5 = inlined_call_operand.vmem [shape: bf16[16,12], index: 5, kind: input, shape index: {}]
  %s6 = inlined_call_operand.vmem [shape: f32[16,1], index: 6, kind: input, shape index: {}]
  %s7 = inlined_call_operand.vmem [shape: f32[1,128], index: 7, kind: output, shape index: {0}]
  %s8 = inlined_call_operand.vmem [shape: f32[16,128], index: 8, kind: output, shape index: {1}]
  %9 = xla_tuple %s7, %s8
  %s10 = sld [smem:[#allocation0]]
  $region46: #{model_forward.1} parent=0
    _
  %s12 = ssub.s32 1, %s10
  %s13 = scalar_select 0, %s12, %s10
  // Predicated region
  $region2: #{model_forward.1} parent=0 // pred_check
    _
  $region3: #{model_forward.1} parent=0 // pred_check_branch
    %15 = sbr.rel (0) target = $region5
  $region4: #{model_forward.1} parent=0 // pred_region
    _
  $region5: #{model_forward.1} parent=0 // pred_fallthru
    _
  // Predicated region
  $region6: #{model_forward.1} parent=0 // pred_check
    _
  $region7: #{model_forward.1} parent=0 // pred_check_branch
    %17 = sbr.rel (0) target = $region9
  $region8: #{model_forward.1} parent=0 // pred_region
    _
  $region9: #{model_forward.1} parent=0 // pred_fallthru
    _
  // Predicated region
  $region10: #{model_forward.1} parent=0 // pred_check
    _
  $region11: #{model_forward.1} parent=0 // pred_check_branch
    %19 = sbr.rel (0) target = $region13
  $region12: #{model_forward.1} parent=0 // pred_region
    _
  $region13: #{model_forward.1} parent=0 // pred_fallthru
    _
  // Predicated region
  $region14: #{model_forward.1} parent=0 // pred_check
    _
  $region15: #{model_forward.1} parent=0 // pred_check_branch
    %21 = sbr.rel (0) target = $region17
  $region16: #{model_forward.1} parent=0 // pred_region
    _
  $region17: #{model_forward.1} parent=0 // pred_fallthru
    _
  // Predicated region
  $region18: #{model_forward.1} parent=0 // pred_check
    _
  $region19: #{model_forward.1} parent=0 // pred_check_branch
    %23 = sbr.rel (0) target = $region21
  $region20: #{model_forward.1} parent=0 // pred_region
    _
  $region21: #{model_forward.1} parent=0 // pred_fallthru
    _
  // Predicated region
  $region22: #{model_forward.1} parent=0 // pred_check
    _
  $region23: #{model_forward.1} parent=0 // pred_check_branch
    %25 = sbr.rel (0) target = $region25
  $region24: #{model_forward.1} parent=0 // pred_region
    _
  $region25: #{model_forward.1} parent=0 // pred_fallthru
    _
  // Predicated region
  $region26: #{model_forward.1} parent=0 // pred_check
    _
  $region27: #{model_forward.1} parent=0 // pred_check_branch
    %27 = sbr.rel (0) target = $region29
  $region28: #{model_forward.1} parent=0 // pred_region
    _
  $region29: #{model_forward.1} parent=0 // pred_fallthru
    _
  %v29 = vlaneseq
  %v30 = vshrl.u32 %v29, 7
  %v31 = vadd.s32 %v30, 8
  %v32 = vld [vmem:[%s0] sm:$0x1]
  %v33 = vlaneseq
  %v34 = vshrl.u32 %v33, 7
  %v35 = vsub.s32 0, %v34
  %v36 = vrot.slane %v32, %v35
  %vm37 = vcmp.eq.s32.totalorder %v30, %v36
  %vm38 = vcmp.eq.s32.totalorder %v31, %v36
  %v39 = vsel %vm37, 1, 0
  %v40 = vsel %vm38, 1, 0
  %v41 = vcvt.s32.f32 %v39
  %v42 = vcvt.s32.f32 %v40
  %v43 = vpack.c.bf16 %v42, %v41
  %v44 = vld [vmem:[%s1] sm:$0x1]
  %v45 = vlaneseq
  %v46 = vshrl.u32 %v45, 7
  %v47 = vsub.s32 0, %v46
  %v48 = vrot.slane %v44, %v47
  %vm49 = vcmp.eq.s32.totalorder %v30, %v48
  %vm50 = vcmp.eq.s32.totalorder %v31, %v48
  %v51 = vsel %vm49, 1, 0
  %v52 = vsel %vm50, 1, 0
  %v53 = vcvt.s32.f32 %v51
  %v54 = vcvt.s32.f32 %v52
  %v55 = vpack.c.bf16 %v54, %v53
  %v56 = vld [vmem:[%s2] sm:$0x1]
  %v57 = vlaneseq
  %v58 = vshrl.u32 %v57, 7
  %v59 = vsub.s32 0, %v58
  %v60 = vrot.slane %v56, %v59
  %vm61 = vcmp.eq.s32.totalorder %v30, %v60
  %vm62 = vcmp.eq.s32.totalorder %v31, %v60
  %v63 = vsel %vm61, 1, 0
  %v64 = vsel %vm62, 1, 0
  %v65 = vcvt.s32.f32 %v63
  %v66 = vcvt.s32.f32 %v64
  %v67 = vpack.c.bf16 %v66, %v65
  %v68 = vld [vmem:[%s3] sm:$0xf]
  %v69 = vld [vmem:[%s3 + $0x4] sm:$0xf]
  %v70 = vld [vmem:[%s3 + $0x8] sm:$0xf]
  %v71 = vld [vmem:[%s3 + $0xc] sm:$0xf]
  %v76 = vunpack.c.l.b16 %v68
  %v77 = vunpack.c.l.b16 %v69
  %v78 = vunpack.c.l.b16 %v70
  %v79 = vunpack.c.l.b16 %v71
  %v80 = vpack.c.b16 %v77, %v76
  %v81 = vpack.c.b16 %v79, %v78
  %vm82 = vcmask 80896
  %v84 = vsel %vm82, %v80, 0
  %v87 = vsel %vm82, %v81, 0
  %vm89 = vcmask 1044480
  %v91 = vsel %vm89, %v43, 0
  %93 = vmatprep.subr.bf16.mxu0 0
  %94 = vmatpush1.bf16.msra.mxu0 %v91
  %95 = vmatprep.subr.bf16.mxu0 0
  %96 = vmatpush1.bf16.msra.mxu0 0
  %97 = vmatprep.subr.bf16.mxu0 0
  %98 = vmatpush1.bf16.msra.mxu0 0
  %99 = vmatprep.subr.bf16.mxu0 0
  %100 = vmatpush1.bf16.msra.mxu0 0
  %101 = vmatprep.subr.bf16.mxu0 0
  %102 = vmatpush1.bf16.msra.mxu0 0
  %103 = vmatprep.subr.bf16.mxu0 0
  %104 = vmatpush1.bf16.msra.mxu0 0
  %105 = vmatprep.subr.bf16.mxu0 0
  %106 = vmatpush1.bf16.msra.mxu0 0
  %107 = vmatprep.subr.bf16.mxu0 0
  %108 = vmatpush1.bf16.msra.mxu0 0
  %109 = vmatprep.subr.bf16.mxu0 0
  %110 = vmatpush1.bf16.msra.mxu0 0
  %111 = vmatprep.subr.bf16.mxu0 0
  %112 = vmatpush1.bf16.msra.mxu0 0
  %113 = vmatprep.subr.bf16.mxu0 0
  %114 = vmatpush1.bf16.msra.mxu0 0
  %115 = vmatprep.subr.bf16.mxu0 0
  %116 = vmatpush1.bf16.msra.mxu0 0
  %117 = vmatprep.subr.bf16.mxu0 0
  %118 = vmatpush1.bf16.msra.mxu0 0
  %119 = vmatprep.subr.bf16.mxu0 0
  %120 = vmatpush1.bf16.msra.mxu0 0
  %121 = vmatprep.subr.bf16.mxu0 0
  %122 = vmatpush1.bf16.msra.mxu0 0
  %123 = vmatprep.subr.bf16.mxu0 0
  %124 = vmatpush1.bf16.msra.mxu0 0
  %125 = vmatprep.mubr.bf16.mxu0 0
  %126 = vmatmul.mubr.bf16.gmra.mrb[0].mxu0 %v84
  %v127 = vpop.f32.mrb[0].mxu0
  %v128 = vadd.f32 0.0, %v127
  %v129 = vpop.f32.mrb[0].mxu0
  %v130 = vpop.f32.mrb[0].mxu0
  %v131 = vadd.f32 0.0, %v130
  %v132 = vpop.f32.mrb[0].mxu0
  %133 = vmatprep.mubr.bf16.mxu0 0
  %134 = vmatmul.mubr.bf16.gmra.mrb[0].mxu0 %v87
  %v135 = vpop.f32.mrb[0].mxu0
  %v136 = vadd.f32 0.0, %v135
  %v137 = vpop.f32.mrb[0].mxu0
  %v138 = vpop.f32.mrb[0].mxu0
  %v139 = vadd.f32 0.0, %v138
  %v140 = vpop.f32.mrb[0].mxu0
  %141 = vdwg.mxu0
  %v142 = vld [vmem:[%s4] sm:$0xf]
  %v143 = vld [vmem:[%s4 + $0x4] sm:$0xf]
  %v144 = vld [vmem:[%s4 + $0x8] sm:$0xf]
  %v145 = vld [vmem:[%s4 + $0xc] sm:$0xf]
  %v150 = vunpack.c.l.b16 %v142
  %v151 = vunpack.c.l.b16 %v143
  %v152 = vunpack.c.l.b16 %v144
  %v153 = vunpack.c.l.b16 %v145
  %v154 = vpack.c.b16 %v151, %v150
  %v155 = vpack.c.b16 %v153, %v152
  %vm156 = vcmask 97280
  %v158 = vsel %vm156, %v154, 0
  %v161 = vsel %vm156, %v155, 0
  %vm163 = vcmask 1045504
  %v165 = vsel %vm163, %v55, 0
  %167 = vmatprep.subr.bf16.mxu0 0
  %168 = vmatpush1.bf16.msra.mxu0 %v165
  %169 = vmatprep.subr.bf16.mxu0 0
  %170 = vmatpush1.bf16.msra.mxu0 0
  %171 = vmatprep.subr.bf16.mxu0 0
  %172 = vmatpush1.bf16.msra.mxu0 0
  %173 = vmatprep.subr.bf16.mxu0 0
  %174 = vmatpush1.bf16.msra.mxu0 0
  %175 = vmatprep.subr.bf16.mxu0 0
  %176 = vmatpush1.bf16.msra.mxu0 0
  %177 = vmatprep.subr.bf16.mxu0 0
  %178 = vmatpush1.bf16.msra.mxu0 0
  %179 = vmatprep.subr.bf16.mxu0 0
  %180 = vmatpush1.bf16.msra.mxu0 0
  %181 = vmatprep.subr.bf16.mxu0 0
  %182 = vmatpush1.bf16.msra.mxu0 0
  %183 = vmatprep.subr.bf16.mxu0 0
  %184 = vmatpush1.bf16.msra.mxu0 0
  %185 = vmatprep.subr.bf16.mxu0 0
  %186 = vmatpush1.bf16.msra.mxu0 0
  %187 = vmatprep.subr.bf16.mxu0 0
  %188 = vmatpush1.bf16.msra.mxu0 0
  %189 = vmatprep.subr.bf16.mxu0 0
  %190 = vmatpush1.bf16.msra.mxu0 0
  %191 = vmatprep.subr.bf16.mxu0 0
  %192 = vmatpush1.bf16.msra.mxu0 0
  %193 = vmatprep.subr.bf16.mxu0 0
  %194 = vmatpush1.bf16.msra.mxu0 0
  %195 = vmatprep.subr.bf16.mxu0 0
  %196 = vmatpush1.bf16.msra.mxu0 0
  %197 = vmatprep.subr.bf16.mxu0 0
  %198 = vmatpush1.bf16.msra.mxu0 0
  %199 = vmatprep.mubr.bf16.mxu0 0
  %200 = vmatmul.mubr.bf16.gmra.mrb[0].mxu0 %v158
  %v201 = vpop.f32.mrb[0].mxu0
  %v202 = vadd.f32 0.0, %v201
  %v203 = vpop.f32.mrb[0].mxu0
  %v204 = vpop.f32.mrb[0].mxu0
  %v205 = vadd.f32 0.0, %v204
  %v206 = vpop.f32.mrb[0].mxu0
  %207 = vmatprep.mubr.bf16.mxu0 0
  %208 = vmatmul.mubr.bf16.gmra.mrb[0].mxu0 %v161
  %v209 = vpop.f32.mrb[0].mxu0
  %v210 = vadd.f32 0.0, %v209
  %v211 = vpop.f32.mrb[0].mxu0
  %v212 = vpop.f32.mrb[0].mxu0
  %v213 = vadd.f32 0.0, %v212
  %v214 = vpop.f32.mrb[0].mxu0
  %215 = vdwg.mxu0
  %v216 = vmul.f32 %v128, %v202
  %v217 = vmul.f32 %v131, %v205
  %v218 = vmul.f32 %v136, %v210
  %v219 = vmul.f32 %v139, %v213
  %v220 = vadd.f32 %v216, %v217
  %v221 = vadd.f32 %v220, %v218
  %v222 = vadd.f32 %v221, %v219
  %v223 = vrot.slane %v222, 4
  %v224 = vadd.f32 %v222, %v223
  %v225 = vrot.slane %v224, 2
  %v226 = vadd.f32 %v224, %v225
  %v227 = vrot.slane %v226, 1
  %v228 = vadd.f32 %v226, %v227
  %229 = vst [vmem:[%s7] sm:$0x1] %v228
  %v230 = vld [vmem:[%s5] sm:$0xf]
  %v231 = vld [vmem:[%s5 + $0x4] sm:$0xf]
  %v232 = vld [vmem:[%s6] sm:$0xff]
  %v233 = vld [vmem:[%s6 + $0x8] sm:$0xff]
  %235 = vset.pattern.permute.xlu0 0
  %236 = vperm.xlu0 %235, %v232
  %v237 = vpop.permute.xlu0 %236
  %240 = vset.pattern.permute.xlu0 0
  %241 = vperm.xlu0 %240, %v233
  %v242 = vpop.permute.xlu0 %241
  %v246 = vunpack.c.l.b16 %v230
  %v247 = vunpack.c.l.b16 %v231
  %v248 = vpack.c.b16 %v247, %v246
  %v250 = vsel %vm156, %v248, 0
  %v253 = vsel %vm163, %v67, 0
  %255 = vmatprep.subr.bf16.mxu0 0
  %256 = vmatpush1.bf16.msra.mxu0 %v253
  %257 = vmatprep.subr.bf16.mxu0 0
  %258 = vmatpush1.bf16.msra.mxu0 0
  %259 = vmatprep.subr.bf16.mxu0 0
  %260 = vmatpush1.bf16.msra.mxu0 0
  %261 = vmatprep.subr.bf16.mxu0 0
  %262 = vmatpush1.bf16.msra.mxu0 0
  %263 = vmatprep.subr.bf16.mxu0 0
  %264 = vmatpush1.bf16.msra.mxu0 0
  %265 = vmatprep.subr.bf16.mxu0 0
  %266 = vmatpush1.bf16.msra.mxu0 0
  %267 = vmatprep.subr.bf16.mxu0 0
  %268 = vmatpush1.bf16.msra.mxu0 0
  %269 = vmatprep.subr.bf16.mxu0 0
  %270 = vmatpush1.bf16.msra.mxu0 0
  %271 = vmatprep.subr.bf16.mxu0 0
  %272 = vmatpush1.bf16.msra.mxu0 0
  %273 = vmatprep.subr.bf16.mxu0 0
  %274 = vmatpush1.bf16.msra.mxu0 0
  %275 = vmatprep.subr.bf16.mxu0 0
  %276 = vmatpush1.bf16.msra.mxu0 0
  %277 = vmatprep.subr.bf16.mxu0 0
  %278 = vmatpush1.bf16.msra.mxu0 0
  %279 = vmatprep.subr.bf16.mxu0 0
  %280 = vmatpush1.bf16.msra.mxu0 0
  %281 = vmatprep.subr.bf16.mxu0 0
  %282 = vmatpush1.bf16.msra.mxu0 0
  %283 = vmatprep.subr.bf16.mxu0 0
  %284 = vmatpush1.bf16.msra.mxu0 0
  %285 = vmatprep.subr.bf16.mxu0 0
  %286 = vmatpush1.bf16.msra.mxu0 0
  %287 = vmatprep.mubr.bf16.mxu0 0
  %288 = vmatmul.mubr.bf16.gmra.mrb[0].mxu0 %v250
  %v289 = vpop.f32.mrb[0].mxu0
  %v290 = vadd.f32 %v237, %v289
  %v291 = vpop.f32.mrb[0].mxu0
  %v292 = vpop.f32.mrb[0].mxu0
  %v293 = vadd.f32 %v242, %v292
  %v294 = vpop.f32.mrb[0].mxu0
  %295 = vdwg.mxu0
  %296 = vst [vmem:[%s8] sm:$0xff] %v290
  %297 = vst [vmem:[%s8 + $0x8] sm:$0xff] %v293
  // Predicated region
  $region30: #{model_forward.1} parent=0 // pred_check
    _
  $region31: #{model_forward.1} parent=0 // pred_check_branch
    %299 = sbr.rel (0) target = $region33
  $region32: #{model_forward.1} parent=0 // pred_region
    _
  $region33: #{model_forward.1} parent=0 // pred_fallthru
    _
  // Predicated region
  $region34: #{model_forward.1} parent=0 // pred_check
    _
  $region35: #{model_forward.1} parent=0 // pred_check_branch
    %301 = sbr.rel (0) target = $region37
  $region36: #{model_forward.1} parent=0 // pred_region
    _
  $region37: #{model_forward.1} parent=0 // pred_fallthru
    _
  // Predicated region
  $region38: #{model_forward.1} parent=0 // pred_check
    _
  $region39: #{model_forward.1} parent=0 // pred_check_branch
    %303 = sbr.rel (0) target = $region41
  $region40: #{model_forward.1} parent=0 // pred_region
    _
  $region41: #{model_forward.1} parent=0 // pred_fallthru
    _
  // Predicated region
  $region42: #{model_forward.1} parent=0 // pred_check
    _
  $region43: #{model_forward.1} parent=0 // pred_check_branch
    %305 = sbr.rel (0) target = $region45
  $region44: #{model_forward.1} parent=0 // pred_region
    _
  $region45: #{model_forward.1} parent=0 // pred_fallthru
    _

</llo_original>
